<compile_context>
chip_gen: v6e
topology: v6e:2x2x1
jax: 0.10.0
libtpu: 0.0.40
codegen_flags: <defaults>
</compile_context>

<pallas_src>
import functools

import jax
import jax.numpy as jnp
from jax.experimental import pallas as pl
from jax.experimental.pallas import tpu as pltpu


def _round_up(n, m):
    return ((n + m - 1) // m) * m


def rnn_kernel(x_ref, w_ih_ref, w_hh_ref, b_ref, w_out_ref, b_out_ref,
               out_ref, h_ref, *, seq_len, t_chunk, o_valid, n_chains):
    """One (batch block, time chunk) grid point.

    x_ref:     (t_chunk, Bblk, I_p)   current time chunk of this batch block
    w_ih_ref:  (I_p, H_p)             (transposed vs PyTorch (H, I))
    w_hh_ref:  (H_p, H_p)             (transposed vs PyTorch (H, H))
    b_ref:     (1, H_p)               b_ih + b_hh
    w_out_ref: (H_p, O_p)
    b_out_ref: (1, O_p)
    out_ref:   (Bblk, O_p)            written only on the last time chunk
    h_ref:     VMEM scratch (Bblk, H_p), persists across time chunks
    """
    ti = pl.program_id(1)
    n_ti = pl.num_programs(1)
    Bblk = x_ref.shape[1]
    I = x_ref.shape[2]
    H = w_hh_ref.shape[0]

    # Zero initial hidden state at the first time chunk of each batch block
    # (matches RNN.initHidden()).
    @pl.when(ti == 0)
    def _():
        h_ref[...] = jnp.zeros_like(h_ref)

    # Hoist weight loads out of the recurrence: one VMEM load, reused S times.
    w_hh = w_hh_ref[...]

    # ---- Chunked input projection: ONE (t_chunk*Bblk, I) @ (I, H) matmul ----
    # Kept as a value (no scratch round trip); Bblk is sublane-aligned so the
    # leading-dim merge/split reshapes are layout-free.
    x2d = x_ref[...].reshape(t_chunk * Bblk, I)
    proj = jnp.dot(x2d, w_ih_ref[...], preferred_element_type=jnp.float32)
    proj = (proj + b_ref[...]).reshape(t_chunk, Bblk, H)

    # ---- Serial recurrence over this chunk -------------------------------
    # n_chains independent batch sub-chains interleaved per timestep to hide
    # MXU fill / EUP tanh latency of the latency-bound serial chain.
    half = Bblk // n_chains
    h0 = h_ref[...]
    hs = [h0[c * half:(c + 1) * half, :] for c in range(n_chains)]

    needs_mask = (seq_len % t_chunk) != 0
    for t in range(t_chunk):                       # bounded unroll (<= t_chunk)
        gs = [jnp.dot(hs[c], w_hh, preferred_element_type=jnp.float32)
              for c in range(n_chains)]
        new = [jnp.tanh(proj[t, c * half:(c + 1) * half, :] + gs[c])
               for c in range(n_chains)]
        if needs_mask:
            # Padded (beyond-S) timesteps must not advance the hidden state.
            keep = ((ti * t_chunk + t) < seq_len).astype(jnp.float32)  # scalar
            hs = [keep * new[c] + (1.0 - keep) * hs[c] for c in range(n_chains)]
        else:
            hs = new

    for c in range(n_chains):                      # static sublane-aligned stores
        h_ref[c * half:(c + 1) * half, :] = hs[c]

    # ---- Linear + LogSoftmax(dim=1) on the final hidden state ------------
    @pl.when(ti == n_ti - 1)
    def _():
        h_last = h_ref[...]
        logits = (jnp.dot(h_last, w_out_ref[...],
                          preferred_element_type=jnp.float32)
                  + b_out_ref[...])                # (Bblk, O_p)
        # Mask padded output columns (f32 only: -1e30 stays finite).
        col = jax.lax.broadcasted_iota(jnp.int32, logits.shape, 1)
        logits = jnp.where(col < o_valid, logits, jnp.float32(-1e30))
        m = jnp.max(logits, axis=-1, keepdims=True)
        shifted = logits - m
        lse = jnp.log(jnp.sum(jnp.exp(shifted), axis=-1, keepdims=True))
        out_ref[...] = (shifted - lse).astype(out_ref.dtype)


def rnn_forward(x, w_ih, w_hh, b, w_out, b_out, *, b_blk=None, t_chunk=None):
    """x: (S, B, I) seq-first like nn.RNN. Weights already transposed (in, out)."""
    S, B, I = x.shape
    H = w_hh.shape[0]
    O = w_out.shape[1]

    # Lane-dense padding on I/H/O; sublane padding on batch.
    I_p = _round_up(I, 128)
    H_p = _round_up(H, 128)
    O_p = _round_up(O, 128)

    # Batch block: fill the MXU M dimension (up to 128 rows) while staying a
    # multiple of 8 (f32 sublanes) / 16 (enables 2 interleaved chains).  For
    # real batch sizes prefer b_blk giving >=2 blocks so the "parallel" grid
    # axis shards across v7x's two TensorCores.
    if b_blk is None:
        b_blk = min(_round_up(B, 8), 128)
        if b_blk >= 16:
            b_blk = _round_up(b_blk, 16)
    assert b_blk % 8 == 0
    B_p = _round_up(B, b_blk)
    n_batch_blocks = B_p // b_blk
    n_chains = 2 if (b_blk >= 16 and b_blk % 16 == 0) else 1

    # Time chunk bounds the in-kernel unroll + per-chunk projection footprint;
    # the grid axis handles arbitrarily long S.
    if t_chunk is None:
        t_chunk = min(S, 16)
    S_p = _round_up(S, t_chunk)
    n_time_chunks = S_p // t_chunk

    x_p = jnp.pad(x, ((0, S_p - S), (0, B_p - B), (0, I_p - I)))
    w_ih_p = jnp.pad(w_ih, ((0, I_p - I), (0, H_p - H)))
    w_hh_p = jnp.pad(w_hh, ((0, H_p - H), (0, H_p - H)))
    b_p = jnp.pad(b, ((0, 0), (0, H_p - H)))
    w_out_p = jnp.pad(w_out, ((0, H_p - H), (0, O_p - O)))
    b_out_p = jnp.pad(b_out, ((0, 0), (0, O_p - O)))
    # NOTE: with b_blk < B_p the x block slices the middle (batch) dim; if the
    # per-block input DMA ever shows up in the trace, pre-transpose x to
    # (B, S, I) in this wrapper instead.

    flops = (2 * S_p * B_p * I_p * H_p          # input projection
             + 2 * S_p * B_p * H_p * H_p        # recurrence
             + 2 * B_p * H_p * O_p)             # output layer
    bytes_accessed = 4 * (x_p.size
                          + n_batch_blocks * (w_ih_p.size + w_hh_p.size
                                              + b_p.size + w_out_p.size
                                              + b_out_p.size)
                          + B_p * O_p)
    transcendentals = S_p * B_p * H_p + B_p * O_p  # tanh + exp

    # VMEM working-set estimate; only raise the scoped limit when needed and
    # cap below v7x's 64 MiB physical VMEM.
    vmem_est = 4 * (2 * t_chunk * b_blk * I_p                       # x blocks
                    + 2 * (I_p * H_p + H_p * H_p + H_p
                           + H_p * O_p + O_p)                       # weights
                    + 2 * b_blk * O_p                               # out block
                    + b_blk * H_p                                   # h scratch
                    + 2 * t_chunk * b_blk * H_p)                    # proj value
    compiler_kwargs = {}
    if vmem_est > 12 * 1024 * 1024:
        compiler_kwargs["vmem_limit_bytes"] = min(int(vmem_est * 1.5),
                                                  48 * 1024 * 1024)

    kernel = functools.partial(rnn_kernel, seq_len=S, t_chunk=t_chunk,
                               o_valid=O, n_chains=n_chains)

    out_p = pl.pallas_call(
        kernel,
        out_shape=jax.ShapeDtypeStruct((B_p, O_p), jnp.float32),
        grid_spec=pltpu.PrefetchScalarGridSpec(
            num_scalar_prefetch=0,
            grid=(n_batch_blocks, n_time_chunks),
            in_specs=[
                pl.BlockSpec((t_chunk, b_blk, I_p),
                             lambda bi, ti: (ti, bi, 0)),            # x chunk
                pl.BlockSpec((I_p, H_p), lambda bi, ti: (0, 0)),     # W_ih^T
                pl.BlockSpec((H_p, H_p), lambda bi, ti: (0, 0)),     # W_hh^T
                pl.BlockSpec((1, H_p), lambda bi, ti: (0, 0)),       # b_ih+b_hh
                pl.BlockSpec((H_p, O_p), lambda bi, ti: (0, 0)),     # W_out^T
                pl.BlockSpec((1, O_p), lambda bi, ti: (0, 0)),       # b_out
            ],
            out_specs=pl.BlockSpec((b_blk, O_p), lambda bi, ti: (bi, 0)),
            scratch_shapes=[pltpu.VMEM((b_blk, H_p), jnp.float32)],  # hidden
        ),
        compiler_params=pltpu.CompilerParams(
            dimension_semantics=("parallel", "arbitrary"),
            **compiler_kwargs),
        cost_estimate=pl.CostEstimate(flops=flops,
                                      transcendentals=transcendentals,
                                      bytes_accessed=bytes_accessed),
    )(x_p, w_ih_p, w_hh_p, b_p, w_out_p, b_out_p)

    return out_p[:B, :O]


def rnn_reference(x, w_ih, w_hh, b, w_out, b_out):
    """Plain JAX reference matching torch semantics (zero initial hidden)."""
    S, B, I = x.shape
    H = w_hh.shape[0]
    h = jnp.zeros((B, H), jnp.float32)

    def step(h, x_t):
        h_new = jnp.tanh(x_t @ w_ih + h @ w_hh + b)
        return h_new, h_new

    h_last, _ = jax.lax.scan(step, h, x)
    logits = h_last @ w_out + b_out
    return jax.nn.log_softmax(logits, axis=1)


if __name__ == "__main__":
    def make_inputs(key, S, B, I, H, O):
        k = jax.random.split(key, 7)
        # PyTorch stores W_ih as (H, I); kernel/reference use transposed (I, H).
        x = jax.random.normal(k[0], (S, B, I), jnp.float32)
        w_ih = jax.random.normal(k[1], (I, H), jnp.float32) * 0.1
        w_hh = jax.random.normal(k[2], (H, H), jnp.float32) * 0.1
        b_ih = jax.random.normal(k[3], (H,), jnp.float32) * 0.1
        b_hh = jax.random.normal(k[4], (H,), jnp.float32) * 0.1
        b = (b_ih + b_hh).reshape(1, H)
        w_out = jax.random.normal(k[5], (H, O), jnp.float32) * 0.1
        b_out = (jax.random.normal(k[6], (O,), jnp.float32) * 0.1).reshape(1, O)
        return x, w_ih, w_hh, b, w_out, b_out

    # Case 1: module-spec toy shapes (seq=8, batch=2, in=16, hidden=32, out=8).
    args1 = make_inputs(jax.random.PRNGKey(0), 8, 2, 16, 32, 8)
    out1 = jax.block_until_ready(rnn_forward(*args1))
    ref1 = rnn_reference(*args1)
    assert out1.shape == (2, 8)
    assert jnp.allclose(out1, ref1, atol=2e-5, rtol=2e-5), (out1, ref1)

    # Case 2: exercises multiple batch blocks, multiple time chunks,
    # padded-timestep masking and the 2-chain interleaved recurrence.
    args2 = make_inputs(jax.random.PRNGKey(1), 20, 18, 16, 32, 8)
    out2 = jax.block_until_ready(rnn_forward(*args2, b_blk=16, t_chunk=16))
    ref2 = rnn_reference(*args2)
    assert out2.shape == (18, 8)
    assert jnp.allclose(out2, ref2, atol=2e-5, rtol=2e-5), (out2, ref2)

    print("KERNEL_OK")
</pallas_src>

<mosaic_0001>
module attributes {stable_mosaic.version = 11 : i64} {
  func.func @rnn_kernel(%arg0: i32, %arg1: i32, %arg2: memref<8x8x128xf32, #tpu.memory_space<vmem>>, %arg3: memref<128x128xf32, #tpu.memory_space<vmem>>, %arg4: memref<128x128xf32, #tpu.memory_space<vmem>>, %arg5: memref<1x128xf32, #tpu.memory_space<vmem>>, %arg6: memref<128x128xf32, #tpu.memory_space<vmem>>, %arg7: memref<1x128xf32, #tpu.memory_space<vmem>>, %arg8: memref<8x128xf32, #tpu.memory_space<vmem>>, %arg9: memref<8x128xf32, #tpu.memory_space<vmem>>) attributes {dimension_semantics = [#tpu.dimension_semantics<parallel>, #tpu.dimension_semantics<arbitrary>], iteration_bounds = array<i64: 1, 1>, scalar_prefetch = 0 : i64, scratch_operands = 1 : i64, tpu.core_type = #tpu.core_type<tc>, window_params = [{transform_indices = @transform_0, window_bounds = array<i64: 8, 8, 128>}, {pipeline_mode = #tpu.pipeline_mode<synchronous>, transform_indices = @transform_1, window_bounds = array<i64: 128, 128>}, {pipeline_mode = #tpu.pipeline_mode<synchronous>, transform_indices = @transform_2, window_bounds = array<i64: 128, 128>}, {pipeline_mode = #tpu.pipeline_mode<synchronous>, transform_indices = @transform_3, window_bounds = array<i64: 1, 128>}, {pipeline_mode = #tpu.pipeline_mode<synchronous>, transform_indices = @transform_4, window_bounds = array<i64: 128, 128>}, {pipeline_mode = #tpu.pipeline_mode<synchronous>, transform_indices = @transform_5, window_bounds = array<i64: 1, 128>}, {transform_indices = @transform_6, window_bounds = array<i64: 8, 128>}]} {
    %c0_i32 = arith.constant 0 : i32
    %0 = arith.cmpi eq, %arg1, %c0_i32 : i32
    %1 = arith.extui %0 : i1 to i32
    %c0_i32_0 = arith.constant 0 : i32
    %2 = arith.cmpi ne, %1, %c0_i32_0 : i32
    scf.if %2 {
      %cst_23 = arith.constant 0.000000e+00 : f32
      %57 = vector.broadcast %cst_23 : f32 to vector<8x128xf32>
      %c0_24 = arith.constant 0 : index
      %c0_25 = arith.constant 0 : index
      %58 = vector.load %arg9[%c0_24, %c0_25] : memref<8x128xf32, #tpu.memory_space<vmem>>, vector<8x128xf32>
      tpu.vector_store %arg9[%c0_24, %c0_25], %57 {strides = array<i32>} : memref<8x128xf32, #tpu.memory_space<vmem>>, vector<8x128xf32>,
    } else {
    }
    %c0 = arith.constant 0 : index
    %c0_1 = arith.constant 0 : index
    %3 = vector.load %arg4[%c0, %c0_1] : memref<128x128xf32, #tpu.memory_space<vmem>>, vector<128x128xf32>
    %c0_2 = arith.constant 0 : index
    %c0_3 = arith.constant 0 : index
    %c0_4 = arith.constant 0 : index
    %4 = vector.load %arg2[%c0_2, %c0_3, %c0_4] : memref<8x8x128xf32, #tpu.memory_space<vmem>>, vector<8x8x128xf32>
    %5 = vector.shape_cast %4 : vector<8x8x128xf32> to vector<64x128xf32>
    %c0_5 = arith.constant 0 : index
    %c0_6 = arith.constant 0 : index
    %6 = vector.load %arg3[%c0_5, %c0_6] : memref<128x128xf32, #tpu.memory_space<vmem>>, vector<128x128xf32>
    %cst = arith.constant dense<0.000000e+00> : vector<64x128xf32>
    %7 = tpu.matmul %5, %6, %cst {dimension_numbers = #tpu.dot_dimension_numbers<[1], [0], [0], [1], [0, 0, 1, 1], [], []>} : vector<64x128xf32>, vector<128x128xf32>, vector<64x128xf32> -> vector<64x128xf32>
    %c0_7 = arith.constant 0 : index
    %c0_8 = arith.constant 0 : index
    %8 = vector.load %arg5[%c0_7, %c0_8] : memref<1x128xf32, #tpu.memory_space<vmem>>, vector<1x128xf32>
    %9 = vector.broadcast %8 : vector<1x128xf32> to vector<64x128xf32>
    %10 = arith.addf %7, %9 : vector<64x128xf32>
    %11 = vector.shape_cast %10 : vector<64x128xf32> to vector<8x8x128xf32>
    %c0_9 = arith.constant 0 : index
    %c0_10 = arith.constant 0 : index
    %12 = vector.load %arg9[%c0_9, %c0_10] : memref<8x128xf32, #tpu.memory_space<vmem>>, vector<8x128xf32>
    %cst_11 = arith.constant dense<0.000000e+00> : vector<8x128xf32>
    %13 = tpu.matmul %12, %3, %cst_11 {dimension_numbers = #tpu.dot_dimension_numbers<[1], [0], [0], [1], [0, 0, 1, 1], [], []>} : vector<8x128xf32>, vector<128x128xf32>, vector<8x128xf32> -> vector<8x128xf32>
    %14 = vector.extract_strided_slice %11 {offsets = [0, 0, 0], sizes = [1, 8, 128], strides = [1, 1, 1]} : vector<8x8x128xf32> to vector<1x8x128xf32>
    %15 = vector.shape_cast %14 : vector<1x8x128xf32> to vector<8x128xf32>
    %16 = arith.addf %15, %13 : vector<8x128xf32>
    %17 = math.tanh %16 : vector<8x128xf32>
    %cst_12 = arith.constant dense<0.000000e+00> : vector<8x128xf32>
    %18 = tpu.matmul %17, %3, %cst_12 {dimension_numbers = #tpu.dot_dimension_numbers<[1], [0], [0], [1], [0, 0, 1, 1], [], []>} : vector<8x128xf32>, vector<128x128xf32>, vector<8x128xf32> -> vector<8x128xf32>
    %19 = vector.extract_strided_slice %11 {offsets = [1, 0, 0], sizes = [1, 8, 128], strides = [1, 1, 1]} : vector<8x8x128xf32> to vector<1x8x128xf32>
    %20 = vector.shape_cast %19 : vector<1x8x128xf32> to vector<8x128xf32>
    %21 = arith.addf %20, %18 : vector<8x128xf32>
    %22 = math.tanh %21 : vector<8x128xf32>
    %cst_13 = arith.constant dense<0.000000e+00> : vector<8x128xf32>
    %23 = tpu.matmul %22, %3, %cst_13 {dimension_numbers = #tpu.dot_dimension_numbers<[1], [0], [0], [1], [0, 0, 1, 1], [], []>} : vector<8x128xf32>, vector<128x128xf32>, vector<8x128xf32> -> vector<8x128xf32>
    %24 = vector.extract_strided_slice %11 {offsets = [2, 0, 0], sizes = [1, 8, 128], strides = [1, 1, 1]} : vector<8x8x128xf32> to vector<1x8x128xf32>
    %25 = vector.shape_cast %24 : vector<1x8x128xf32> to vector<8x128xf32>
    %26 = arith.addf %25, %23 : vector<8x128xf32>
    %27 = math.tanh %26 : vector<8x128xf32>
    %cst_14 = arith.constant dense<0.000000e+00> : vector<8x128xf32>
    %28 = tpu.matmul %27, %3, %cst_14 {dimension_numbers = #tpu.dot_dimension_numbers<[1], [0], [0], [1], [0, 0, 1, 1], [], []>} : vector<8x128xf32>, vector<128x128xf32>, vector<8x128xf32> -> vector<8x128xf32>
    %29 = vector.extract_strided_slice %11 {offsets = [3, 0, 0], sizes = [1, 8, 128], strides = [1, 1, 1]} : vector<8x8x128xf32> to vector<1x8x128xf32>
    %30 = vector.shape_cast %29 : vector<1x8x128xf32> to vector<8x128xf32>
    %31 = arith.addf %30, %28 : vector<8x128xf32>
    %32 = math.tanh %31 : vector<8x128xf32>
    %cst_15 = arith.constant dense<0.000000e+00> : vector<8x128xf32>
    %33 = tpu.matmul %32, %3, %cst_15 {dimension_numbers = #tpu.dot_dimension_numbers<[1], [0], [0], [1], [0, 0, 1, 1], [], []>} : vector<8x128xf32>, vector<128x128xf32>, vector<8x128xf32> -> vector<8x128xf32>
    %34 = vector.extract_strided_slice %11 {offsets = [4, 0, 0], sizes = [1, 8, 128], strides = [1, 1, 1]} : vector<8x8x128xf32> to vector<1x8x128xf32>
    %35 = vector.shape_cast %34 : vector<1x8x128xf32> to vector<8x128xf32>
    %36 = arith.addf %35, %33 : vector<8x128xf32>
    %37 = math.tanh %36 : vector<8x128xf32>
    %cst_16 = arith.constant dense<0.000000e+00> : vector<8x128xf32>
    %38 = tpu.matmul %37, %3, %cst_16 {dimension_numbers = #tpu.dot_dimension_numbers<[1], [0], [0], [1], [0, 0, 1, 1], [], []>} : vector<8x128xf32>, vector<128x128xf32>, vector<8x128xf32> -> vector<8x128xf32>
    %39 = vector.extract_strided_slice %11 {offsets = [5, 0, 0], sizes = [1, 8, 128], strides = [1, 1, 1]} : vector<8x8x128xf32> to vector<1x8x128xf32>
    %40 = vector.shape_cast %39 : vector<1x8x128xf32> to vector<8x128xf32>
    %41 = arith.addf %40, %38 : vector<8x128xf32>
    %42 = math.tanh %41 : vector<8x128xf32>
    %cst_17 = arith.constant dense<0.000000e+00> : vector<8x128xf32>
    %43 = tpu.matmul %42, %3, %cst_17 {dimension_numbers = #tpu.dot_dimension_numbers<[1], [0], [0], [1], [0, 0, 1, 1], [], []>} : vector<8x128xf32>, vector<128x128xf32>, vector<8x128xf32> -> vector<8x128xf32>
    %44 = vector.extract_strided_slice %11 {offsets = [6, 0, 0], sizes = [1, 8, 128], strides = [1, 1, 1]} : vector<8x8x128xf32> to vector<1x8x128xf32>
    %45 = vector.shape_cast %44 : vector<1x8x128xf32> to vector<8x128xf32>
    %46 = arith.addf %45, %43 : vector<8x128xf32>
    %47 = math.tanh %46 : vector<8x128xf32>
    %cst_18 = arith.constant dense<0.000000e+00> : vector<8x128xf32>
    %48 = tpu.matmul %47, %3, %cst_18 {dimension_numbers = #tpu.dot_dimension_numbers<[1], [0], [0], [1], [0, 0, 1, 1], [], []>} : vector<8x128xf32>, vector<128x128xf32>, vector<8x128xf32> -> vector<8x128xf32>
    %49 = vector.extract_strided_slice %11 {offsets = [7, 0, 0], sizes = [1, 8, 128], strides = [1, 1, 1]} : vector<8x8x128xf32> to vector<1x8x128xf32>
    %50 = vector.shape_cast %49 : vector<1x8x128xf32> to vector<8x128xf32>
    %51 = arith.addf %50, %48 : vector<8x128xf32>
    %52 = math.tanh %51 : vector<8x128xf32>
    %c0_19 = arith.constant 0 : index
    %c0_20 = arith.constant 0 : index
    %53 = vector.load %arg9[%c0_19, %c0_20] : memref<8x128xf32, #tpu.memory_space<vmem>>, vector<8x128xf32>
    tpu.vector_store %arg9[%c0_19, %c0_20], %52 {strides = array<i32>} : memref<8x128xf32, #tpu.memory_space<vmem>>, vector<8x128xf32>,
    %c0_i32_21 = arith.constant 0 : i32
    %54 = arith.cmpi eq, %arg1, %c0_i32_21 : i32
    %55 = arith.extui %54 : i1 to i32
    %c0_i32_22 = arith.constant 0 : i32
    %56 = arith.cmpi ne, %55, %c0_i32_22 : i32
    scf.if %56 {
      %c0_23 = arith.constant 0 : index
      %c0_24 = arith.constant 0 : index
      %57 = vector.load %arg9[%c0_23, %c0_24] : memref<8x128xf32, #tpu.memory_space<vmem>>, vector<8x128xf32>
      %c0_25 = arith.constant 0 : index
      %c0_26 = arith.constant 0 : index
      %58 = vector.load %arg6[%c0_25, %c0_26] : memref<128x128xf32, #tpu.memory_space<vmem>>, vector<128x128xf32>
      %cst_27 = arith.constant dense<0.000000e+00> : vector<8x128xf32>
      %59 = tpu.matmul %57, %58, %cst_27 {dimension_numbers = #tpu.dot_dimension_numbers<[1], [0], [0], [1], [0, 0, 1, 1], [], []>} : vector<8x128xf32>, vector<128x128xf32>, vector<8x128xf32> -> vector<8x128xf32>
      %c0_28 = arith.constant 0 : index
      %c0_29 = arith.constant 0 : index
      %60 = vector.load %arg7[%c0_28, %c0_29] : memref<1x128xf32, #tpu.memory_space<vmem>>, vector<1x128xf32>
      %61 = vector.broadcast %60 : vector<1x128xf32> to vector<8x128xf32>
      %62 = arith.addf %59, %61 : vector<8x128xf32>
      %63 = tpu.iota {dimensions = array<i32: 1>} : vector<8x128xi32>
      %c8_i32 = arith.constant 8 : i32
      %64 = vector.broadcast %c8_i32 : i32 to vector<8x128xi32>
      %65 = arith.cmpi slt, %63, %64 : vector<8x128xi32>
      %cst_30 = arith.constant -1.000000e+30 : f32
      %66 = vector.broadcast %cst_30 : f32 to vector<8x128xf32>
      %67 = arith.select %65, %62, %66 : vector<8x128xi1>, vector<8x128xf32>
      %cst_31 = arith.constant dense<0xFF800000> : vector<8xf32>
      %68 = vector.multi_reduction <maximumf>, %67, %cst_31 [1] : vector<8x128xf32> to vector<8xf32>
      %69 = vector.shape_cast %68 : vector<8xf32> to vector<8x1xf32>
      %70 = vector.broadcast %69 : vector<8x1xf32> to vector<8x128xf32>
      %71 = arith.subf %67, %70 : vector<8x128xf32>
      %72 = math.exp %71 : vector<8x128xf32>
      %cst_32 = arith.constant dense<0.000000e+00> : vector<8xf32>
      %73 = vector.multi_reduction <add>, %72, %cst_32 [1] : vector<8x128xf32> to vector<8xf32>
      %74 = vector.shape_cast %73 : vector<8xf32> to vector<8x1xf32>
      %75 = math.log %74 : vector<8x1xf32>
      %76 = vector.broadcast %75 : vector<8x1xf32> to vector<8x128xf32>
      %77 = arith.subf %71, %76 : vector<8x128xf32>
      %c0_33 = arith.constant 0 : index
      %c0_34 = arith.constant 0 : index
      %78 = vector.load %arg8[%c0_33, %c0_34] : memref<8x128xf32, #tpu.memory_space<vmem>>, vector<8x128xf32>
      tpu.vector_store %arg8[%c0_33, %c0_34], %77 {strides = array<i32>} : memref<8x128xf32, #tpu.memory_space<vmem>>, vector<8x128xf32>,
    } else {
    }
    return
  }
  func.func @transform_0(%arg0: i32, %arg1: i32) -> (i32, i32, i32) {
    %c0_i32 = arith.constant 0 : i32
    %c0_i32_0 = arith.constant 0 : i32
    return %arg1, %arg0, %c0_i32 : i32, i32, i32
  }
  func.func @transform_1(%arg0: i32, %arg1: i32) -> (i32, i32) {
    %c0_i32 = arith.constant 0 : i32
    %c0_i32_0 = arith.constant 0 : i32
    %c0_i32_1 = arith.constant 0 : i32
    return %c0_i32, %c0_i32_0 : i32, i32
  }
  func.func @transform_2(%arg0: i32, %arg1: i32) -> (i32, i32) {
    %c0_i32 = arith.constant 0 : i32
    %c0_i32_0 = arith.constant 0 : i32
    %c0_i32_1 = arith.constant 0 : i32
    return %c0_i32, %c0_i32_0 : i32, i32
  }
  func.func @transform_3(%arg0: i32, %arg1: i32) -> (i32, i32) {
    %c0_i32 = arith.constant 0 : i32
    %c0_i32_0 = arith.constant 0 : i32
    %c0_i32_1 = arith.constant 0 : i32
    return %c0_i32, %c0_i32_0 : i32, i32
  }
  func.func @transform_4(%arg0: i32, %arg1: i32) -> (i32, i32) {
    %c0_i32 = arith.constant 0 : i32
    %c0_i32_0 = arith.constant 0 : i32
    %c0_i32_1 = arith.constant 0 : i32
    return %c0_i32, %c0_i32_0 : i32, i32
  }
  func.func @transform_5(%arg0: i32, %arg1: i32) -> (i32, i32) {
    %c0_i32 = arith.constant 0 : i32
    %c0_i32_0 = arith.constant 0 : i32
    %c0_i32_1 = arith.constant 0 : i32
    return %c0_i32, %c0_i32_0 : i32, i32
  }
  func.func @transform_6(%arg0: i32, %arg1: i32) -> (i32, i32) {
    %c0_i32 = arith.constant 0 : i32
    %c0_i32_0 = arith.constant 0 : i32
    return %arg0, %c0_i32 : i32, i32
  }
}

</mosaic_0001>

<llo_original>
// kernel: tpu_custom_call.1
$region0: #{tpu_custom_call.1}
  #allocation0 [shape = 'u32[]', space=smem, size = 0x4, offset = 0x4, fixed_abs, tag = 'smem constant byte address 0x4 - core index']
  #allocation1 [shape = 'u32[144,128]{1,0:T(1,128)}', space=vmem, size = 0x12000, scoped, tag = 'internal scratch']
  #allocation2 [shape = 'f32[8,128]{1,0:T(8,128)}', space=vmem, size = 0x1000, scoped, tag = 'scratch operand']
  %s0 = inlined_call_operand.hbm [shape: f32[8,8,128], index: 0, kind: input, shape index: {}]
  %s1 = inlined_call_operand.hbm [shape: f32[128,128], index: 1, kind: input, shape index: {}]
  %s2 = inlined_call_operand.hbm [shape: f32[128,128], index: 2, kind: input, shape index: {}]
  %s3 = inlined_call_operand.vmem [shape: f32[1,128], index: 3, kind: input, shape index: {}]
  %s4 = inlined_call_operand.hbm [shape: f32[128,128], index: 4, kind: input, shape index: {}]
  %s5 = inlined_call_operand.vmem [shape: f32[1,128], index: 5, kind: input, shape index: {}]
  %s6 = inlined_call_operand.hbm [shape: f32[8,128], index: 6, kind: output, shape index: {}]
  %s7 = sld [smem:[#allocation0]]
  $region58: #{tpu_custom_call.1} parent=0
    _
  %s9 = ssub.s32 1, %s7
  %s10 = scalar_select 0, %s9, %s7
  $region1: #{tpu_custom_call.1} parent=0
    #allocation3 [shape = 'u8[32768]{0}', space=vmem, size = 0x8000, scoped, tag = 'input window, operand 0, single buffered']
    #allocation4 [shape = 's32[1]{0}', space=sflag, size = 0x4, scoped, tag = 'scoped memory for tpu_custom_call.1']
    #allocation5 [shape = 's32[1]{0}', space=sflag, size = 0x4, scoped, tag = 'scoped memory for tpu_custom_call.1']
    #allocation6 [shape = 'u8[65536]{0}', space=vmem, size = 0x10000, scoped, tag = 'input window, operand 1, single buffered']
    #allocation7 [shape = 's32[1]{0}', space=sflag, size = 0x4, scoped, tag = 'scoped memory for tpu_custom_call.1']
    #allocation8 [shape = 'u8[65536]{0}', space=vmem, size = 0x10000, scoped, tag = 'input window, operand 2, single buffered']
    #allocation9 [shape = 'u8[65536]{0}', space=vmem, size = 0x10000, scoped, tag = 'input window, operand 4, single buffered']
    #allocation10 [shape = 's32[1]{0}', space=sflag, size = 0x4, scoped, tag = 'scoped memory for tpu_custom_call.1']
    #allocation11 [shape = 'u8[4096]{0}', space=vmem, size = 0x1000, scoped, tag = 'output window, operand 0, single buffered']
    %11 = vsyncpa [#allocation4], 0
    %12 = vsyncpa [#allocation7], 0
    %13 = vsyncpa [#allocation10], 0
    %14 = vsyncpa [#allocation5], 0
    // Predicated region
    $region2: #{tpu_custom_call.1} parent=1 // pred_check
      _
    $region3: #{tpu_custom_call.1} parent=1 // pred_check_branch
      %16 = sbr.rel (0) target = $region5
    $region4: #{tpu_custom_call.1} parent=1 // pred_region
      %s18 = ssub.s32 1024, 1024
      %19 = vsyncadd [#allocation4], %s18
      %s20 = sshll.u32 [#allocation3], 4
      %s21 = int_to_ptr.vmem [resolvable:$true] %s20
      %26 = dma.hbm_to_vmem [thread:$0]  %s0, 1024, %s21, [#allocation4], 128, 128, 8
    $region5: #{tpu_custom_call.1} parent=1 // pred_fallthru
      _
    // Predicated region
    $region6: #{tpu_custom_call.1} parent=1 // pred_check
      _
    $region7: #{tpu_custom_call.1} parent=1 // pred_check_branch
      %28 = sbr.rel (0) target = $region9
    $region8: #{tpu_custom_call.1} parent=1 // pred_region
      %s30 = ssub.s32 2048, 2048
      %31 = vsyncadd [#allocation7], %s30
      %s32 = sshll.u32 [#allocation6], 4
      %s33 = int_to_ptr.vmem [resolvable:$true] %s32
      %38 = dma.hbm_to_vmem [thread:$0]  %s1, 2048, %s33, [#allocation7], 128, 128, 8
    $region9: #{tpu_custom_call.1} parent=1 // pred_fallthru
      _
    // Predicated region
    $region10: #{tpu_custom_call.1} parent=1 // pred_check
      _
    $region11: #{tpu_custom_call.1} parent=1 // pred_check_branch
      %40 = sbr.rel (0) target = $region13
    $region12: #{tpu_custom_call.1} parent=1 // pred_region
      %s42 = ssub.s32 2048, 2048
      %43 = vsyncadd [#allocation7], %s42
      %s44 = sshll.u32 [#allocation8], 4
      %s45 = int_to_ptr.vmem [resolvable:$true] %s44
      %50 = dma.hbm_to_vmem [thread:$0]  %s2, 2048, %s45, [#allocation7], 128, 128, 8
    $region13: #{tpu_custom_call.1} parent=1 // pred_fallthru
      _
    // Predicated region
    $region14: #{tpu_custom_call.1} parent=1 // pred_check
      _
    $region15: #{tpu_custom_call.1} parent=1 // pred_check_branch
      %52 = sbr.rel (0) target = $region17
    $region16: #{tpu_custom_call.1} parent=1 // pred_region
      _
    $region17: #{tpu_custom_call.1} parent=1 // pred_fallthru
      _
    // Predicated region
    $region18: #{tpu_custom_call.1} parent=1 // pred_check
      _
    $region19: #{tpu_custom_call.1} parent=1 // pred_check_branch
      %54 = sbr.rel (0) target = $region21
    $region20: #{tpu_custom_call.1} parent=1 // pred_region
      %s56 = ssub.s32 2048, 2048
      %57 = vsyncadd [#allocation10], %s56
      %s58 = sshll.u32 [#allocation9], 4
      %s59 = int_to_ptr.vmem [resolvable:$true] %s58
      %64 = dma.hbm_to_vmem [thread:$0]  %s4, 2048, %s59, [#allocation10], 128, 128, 8
    $region21: #{tpu_custom_call.1} parent=1 // pred_fallthru
      _
    // Predicated region
    $region22: #{tpu_custom_call.1} parent=1 // pred_check
      _
    $region23: #{tpu_custom_call.1} parent=1 // pred_check_branch
      %66 = sbr.rel (0) target = $region25
    $region24: #{tpu_custom_call.1} parent=1 // pred_region
      _
    $region25: #{tpu_custom_call.1} parent=1 // pred_fallthru
      _
    // Predicated region
    $region26: #{tpu_custom_call.1} parent=1 // pred_check
      _
    $region27: #{tpu_custom_call.1} parent=1 // pred_check_branch
      %68 = sbr.rel (0) target = $region29
    $region28: #{tpu_custom_call.1} parent=1 // pred_region
      %69 = dma.done [#allocation4], 1024
    $region29: #{tpu_custom_call.1} parent=1 // pred_fallthru
      _
    // Predicated region
    $region30: #{tpu_custom_call.1} parent=1 // pred_check
      _
    $region31: #{tpu_custom_call.1} parent=1 // pred_check_branch
      %71 = sbr.rel (0) target = $region33
    $region32: #{tpu_custom_call.1} parent=1 // pred_region
      %72 = dma.done [#allocation7], 2048
    $region33: #{tpu_custom_call.1} parent=1 // pred_fallthru
      _
    // Predicated region
    $region34: #{tpu_custom_call.1} parent=1 // pred_check
      _
    $region35: #{tpu_custom_call.1} parent=1 // pred_check_branch
      %74 = sbr.rel (0) target = $region37
    $region36: #{tpu_custom_call.1} parent=1 // pred_region
      %75 = dma.done [#allocation7], 2048
    $region37: #{tpu_custom_call.1} parent=1 // pred_fallthru
      _
    // Predicated region
    $region38: #{tpu_custom_call.1} parent=1 // pred_check
      _
    $region39: #{tpu_custom_call.1} parent=1 // pred_check_branch
      %77 = sbr.rel (0) target = $region41
    $region40: #{tpu_custom_call.1} parent=1 // pred_region
      %78 = dma.done [#allocation10], 2048
    $region41: #{tpu_custom_call.1} parent=1 // pred_fallthru
      _
    %p79 = scmp.eq.s32.totalorder 0, 0
    // Predicated region
    $region42: #{tpu_custom_call.1} parent=1 // pred_check
      %p80 = pneg %p79
    $region43: #{tpu_custom_call.1} parent=1 // pred_check_branch
      %82 = sbr.rel (%p80) target = $region45
    $region44: #{tpu_custom_call.1} parent=1 // pred_region
      %83 = vst [vmem:[#allocation2] sm:$0xff] 0.0
    $region45: #{tpu_custom_call.1} parent=1 // pred_fallthru
      _
    %v84 = vld [vmem:[#allocation8] sm:$0xff]
    %v85 = vld [vmem:[#allocation8 + $0x8] sm:$0xff]
    %v86 = vld [vmem:[#allocation8 + $0x10] sm:$0xff]
    %v87 = vld [vmem:[#allocation8 + $0x18] sm:$0xff]
    %v88 = vld [vmem:[#allocation8 + $0x20] sm:$0xff]
    %v89 = vld [vmem:[#allocation8 + $0x28] sm:$0xff]
    %v90 = vld [vmem:[#allocation8 + $0x30] sm:$0xff]
    %v91 = vld [vmem:[#allocation8 + $0x38] sm:$0xff]
    %v92 = vld [vmem:[#allocation8 + $0x40] sm:$0xff]
    %v93 = vld [vmem:[#allocation8 + $0x48] sm:$0xff]
    %v94 = vld [vmem:[#allocation8 + $0x50] sm:$0xff]
    %v95 = vld [vmem:[#allocation8 + $0x58] sm:$0xff]
    %v96 = vld [vmem:[#allocation8 + $0x60] sm:$0xff]
    %v97 = vld [vmem:[#allocation8 + $0x68] sm:$0xff]
    %v98 = vld [vmem:[#allocation8 + $0x70] sm:$0xff]
    %v99 = vld [vmem:[#allocation8 + $0x78] sm:$0xff]
    %v100 = vld [vmem:[#allocation3] sm:$0xff]
    %v101 = vld [vmem:[#allocation3 + $0x8] sm:$0xff]
    %v102 = vld [vmem:[#allocation3 + $0x10] sm:$0xff]
    %v103 = vld [vmem:[#allocation3 + $0x18] sm:$0xff]
    %v104 = vld [vmem:[#allocation3 + $0x20] sm:$0xff]
    %v105 = vld [vmem:[#allocation3 + $0x28] sm:$0xff]
    %v106 = vld [vmem:[#allocation3 + $0x30] sm:$0xff]
    %v107 = vld [vmem:[#allocation3 + $0x38] sm:$0xff]
    %v108 = vld [vmem:[#allocation6] sm:$0xff]
    %v109 = vld [vmem:[#allocation6 + $0x8] sm:$0xff]
    %v110 = vld [vmem:[#allocation6 + $0x10] sm:$0xff]
    %v111 = vld [vmem:[#allocation6 + $0x18] sm:$0xff]
    %v112 = vld [vmem:[#allocation6 + $0x20] sm:$0xff]
    %v113 = vld [vmem:[#allocation6 + $0x28] sm:$0xff]
    %v114 = vld [vmem:[#allocation6 + $0x30] sm:$0xff]
    %v115 = vld [vmem:[#allocation6 + $0x38] sm:$0xff]
    %v116 = vld [vmem:[#allocation6 + $0x40] sm:$0xff]
    %v117 = vld [vmem:[#allocation6 + $0x48] sm:$0xff]
    %v118 = vld [vmem:[#allocation6 + $0x50] sm:$0xff]
    %v119 = vld [vmem:[#allocation6 + $0x58] sm:$0xff]
    %v120 = vld [vmem:[#allocation6 + $0x60] sm:$0xff]
    %v121 = vld [vmem:[#allocation6 + $0x68] sm:$0xff]
    %v122 = vld [vmem:[#allocation6 + $0x70] sm:$0xff]
    %v123 = vld [vmem:[#allocation6 + $0x78] sm:$0xff]
    %v124 = vld [vmem:[%s3] sm:$0x1]
    %v126 = vlaneseq
    %v127 = vshrl.u32 %v126, 7
    %v128 = vsub.s32 0, %v127
    %v129 = vrot.slane %v124, %v128
    %131 = vmatprep.subr.mxu0 0.0
    %132 = vmatpush1.msra.mxu0 %v123
    %133 = vmatprep.subr.mxu0 0.0
    %134 = vmatpush1.msra.mxu0 %v122
    %135 = vmatprep.subr.mxu0 0.0
    %136 = vmatpush1.msra.mxu0 %v121
    %137 = vmatprep.subr.mxu0 0.0
    %138 = vmatpush1.msra.mxu0 %v120
    %139 = vmatprep.subr.mxu0 0.0
    %140 = vmatpush1.msra.mxu0 %v119
    %141 = vmatprep.subr.mxu0 0.0
    %142 = vmatpush1.msra.mxu0 %v118
    %143 = vmatprep.subr.mxu0 0.0
    %144 = vmatpush1.msra.mxu0 %v117
    %145 = vmatprep.subr.mxu0 0.0
    %146 = vmatpush1.msra.mxu0 %v116
    %147 = vmatprep.subr.mxu0 0.0
    %148 = vmatpush1.msra.mxu0 %v115
    %149 = vmatprep.subr.mxu0 0.0
    %150 = vmatpush1.msra.mxu0 %v114
    %151 = vmatprep.subr.mxu0 0.0
    %152 = vmatpush1.msra.mxu0 %v113
    %153 = vmatprep.subr.mxu0 0.0
    %154 = vmatpush1.msra.mxu0 %v112
    %155 = vmatprep.subr.mxu0 0.0
    %156 = vmatpush1.msra.mxu0 %v111
    %157 = vmatprep.subr.mxu0 0.0
    %158 = vmatpush1.msra.mxu0 %v110
    %159 = vmatprep.subr.mxu0 0.0
    %160 = vmatpush1.msra.mxu0 %v109
    %161 = vmatprep.subr.mxu0 0.0
    %162 = vmatpush1.msra.mxu0 %v108
    %163 = vmatprep.subr.mxu0 0.0
    %164 = vmatpush2.msra.mxu0 0.0
    %165 = vmatprep.subr.mxu0 0.0
    %166 = vmatpush2.msra.mxu0 0.0
    %167 = vmatprep.subr.mxu0 0.0
    %168 = vmatpush2.msra.mxu0 0.0
    %169 = vmatprep.subr.mxu0 0.0
    %170 = vmatpush2.msra.mxu0 0.0
    %171 = vmatprep.subr.mxu0 0.0
    %172 = vmatpush2.msra.mxu0 0.0
    %173 = vmatprep.subr.mxu0 0.0
    %174 = vmatpush2.msra.mxu0 0.0
    %175 = vmatprep.subr.mxu0 0.0
    %176 = vmatpush2.msra.mxu0 0.0
    %177 = vmatprep.subr.mxu0 0.0
    %178 = vmatpush2.msra.mxu0 0.0
    %179 = vmatprep.subr.mxu0 0.0
    %180 = vmatpush2.msra.mxu0 0.0
    %181 = vmatprep.subr.mxu0 0.0
    %182 = vmatpush2.msra.mxu0 0.0
    %183 = vmatprep.subr.mxu0 0.0
    %184 = vmatpush2.msra.mxu0 0.0
    %185 = vmatprep.subr.mxu0 0.0
    %186 = vmatpush2.msra.mxu0 0.0
    %187 = vmatprep.subr.mxu0 0.0
    %188 = vmatpush2.msra.mxu0 0.0
    %189 = vmatprep.subr.mxu0 0.0
    %190 = vmatpush2.msra.mxu0 0.0
    %191 = vmatprep.subr.mxu0 0.0
    %192 = vmatpush2.msra.mxu0 0.0
    %193 = vmatprep.subr.mxu0 0.0
    %194 = vmatpush2.msra.mxu0 0.0
    %195 = vmatprep.mubr.f32.mxu0 0.0
    %196 = vmatmul.mubr.f32.gmra.mxu0 %v100
    %v197 = vpop.f32.mrf.mxu0
    %v198 = vadd.f32 %v129, %v197
    %v199 = vpop.f32.mrf.mxu0
    %200 = vmatprep.mubr.f32.mxu0 0.0
    %201 = vmatmul.mubr.f32.gmra.mxu0 %v101
    %v202 = vpop.f32.mrf.mxu0
    %v203 = vadd.f32 %v129, %v202
    %v204 = vpop.f32.mrf.mxu0
    %205 = vmatprep.mubr.f32.mxu0 0.0
    %206 = vmatmul.mubr.f32.gmra.mxu0 %v102
    %v207 = vpop.f32.mrf.mxu0
    %v208 = vadd.f32 %v129, %v207
    %v209 = vpop.f32.mrf.mxu0
    %210 = vmatprep.mubr.f32.mxu0 0.0
    %211 = vmatmul.mubr.f32.gmra.mxu0 %v103
    %v212 = vpop.f32.mrf.mxu0
    %v213 = vadd.f32 %v129, %v212
    %v214 = vpop.f32.mrf.mxu0
    %215 = vmatprep.mubr.f32.mxu0 0.0
    %216 = vmatmul.mubr.f32.gmra.mxu0 %v104
    %v217 = vpop.f32.mrf.mxu0
    %v218 = vadd.f32 %v129, %v217
    %v219 = vpop.f32.mrf.mxu0
    %220 = vmatprep.mubr.f32.mxu0 0.0
    %221 = vmatmul.mubr.f32.gmra.mxu0 %v105
    %v222 = vpop.f32.mrf.mxu0
    %v223 = vadd.f32 %v129, %v222
    %v224 = vpop.f32.mrf.mxu0
    %225 = vmatprep.mubr.f32.mxu0 0.0
    %226 = vmatmul.mubr.f32.gmra.mxu0 %v106
    %v227 = vpop.f32.mrf.mxu0
    %v228 = vadd.f32 %v129, %v227
    %v229 = vpop.f32.mrf.mxu0
    %230 = vmatprep.mubr.f32.mxu0 0.0
    %231 = vmatmul.mubr.f32.gmra.mxu0 %v107
    %v232 = vpop.f32.mrf.mxu0
    %v233 = vadd.f32 %v129, %v232
    %v234 = vpop.f32.mrf.mxu0
    %235 = vdwg.mxu0
    %v236 = vld [vmem:[#allocation2] sm:$0xff]
    %237 = vmatprep.subr.mxu0 0.0
    %238 = vmatpush1.msra.mxu0 %v99
    %239 = vmatprep.subr.mxu0 0.0
    %240 = vmatpush1.msra.mxu0 %v98
    %241 = vmatprep.subr.mxu0 0.0
    %242 = vmatpush1.msra.mxu0 %v97
    %243 = vmatprep.subr.mxu0 0.0
    %244 = vmatpush1.msra.mxu0 %v96
    %245 = vmatprep.subr.mxu0 0.0
    %246 = vmatpush1.msra.mxu0 %v95
    %247 = vmatprep.subr.mxu0 0.0
    %248 = vmatpush1.msra.mxu0 %v94
    %249 = vmatprep.subr.mxu0 0.0
    %250 = vmatpush1.msra.mxu0 %v93
    %251 = vmatprep.subr.mxu0 0.0
    %252 = vmatpush1.msra.mxu0 %v92
    %253 = vmatprep.subr.mxu0 0.0
    %254 = vmatpush1.msra.mxu0 %v91
    %255 = vmatprep.subr.mxu0 0.0
    %256 = vmatpush1.msra.mxu0 %v90
    %257 = vmatprep.subr.mxu0 0.0
    %258 = vmatpush1.msra.mxu0 %v89
    %259 = vmatprep.subr.mxu0 0.0
    %260 = vmatpush1.msra.mxu0 %v88
    %261 = vmatprep.subr.mxu0 0.0
    %262 = vmatpush1.msra.mxu0 %v87
    %263 = vmatprep.subr.mxu0 0.0
    %264 = vmatpush1.msra.mxu0 %v86
    %265 = vmatprep.subr.mxu0 0.0
    %266 = vmatpush1.msra.mxu0 %v85
    %267 = vmatprep.subr.mxu0 0.0
    %268 = vmatpush1.msra.mxu0 %v84
    %269 = vmatprep.subr.mxu0 0.0
    %270 = vmatpush2.msra.mxu0 0.0
    %271 = vmatprep.subr.mxu0 0.0
    %272 = vmatpush2.msra.mxu0 0.0
    %273 = vmatprep.subr.mxu0 0.0
    %274 = vmatpush2.msra.mxu0 0.0
    %275 = vmatprep.subr.mxu0 0.0
    %276 = vmatpush2.msra.mxu0 0.0
    %277 = vmatprep.subr.mxu0 0.0
    %278 = vmatpush2.msra.mxu0 0.0
    %279 = vmatprep.subr.mxu0 0.0
    %280 = vmatpush2.msra.mxu0 0.0
    %281 = vmatprep.subr.mxu0 0.0
    %282 = vmatpush2.msra.mxu0 0.0
    %283 = vmatprep.subr.mxu0 0.0
    %284 = vmatpush2.msra.mxu0 0.0
    %285 = vmatprep.subr.mxu0 0.0
    %286 = vmatpush2.msra.mxu0 0.0
    %287 = vmatprep.subr.mxu0 0.0
    %288 = vmatpush2.msra.mxu0 0.0
    %289 = vmatprep.subr.mxu0 0.0
    %290 = vmatpush2.msra.mxu0 0.0
    %291 = vmatprep.subr.mxu0 0.0
    %292 = vmatpush2.msra.mxu0 0.0
    %293 = vmatprep.subr.mxu0 0.0
    %294 = vmatpush2.msra.mxu0 0.0
    %295 = vmatprep.subr.mxu0 0.0
    %296 = vmatpush2.msra.mxu0 0.0
    %297 = vmatprep.subr.mxu0 0.0
    %298 = vmatpush2.msra.mxu0 0.0
    %299 = vmatprep.subr.mxu0 0.0
    %300 = vmatpush2.msra.mxu0 0.0
    %301 = vmatprep.mubr.f32.mxu0 0.0
    %302 = vmatmul.mubr.f32.gmra.mxu0 %v236
    %v303 = vpop.f32.mrf.mxu0
    %v304 = vadd.f32 0.0, %v303
    %v305 = vpop.f32.mrf.mxu0
    %306 = vdwg.mxu0
    %v307 = vadd.f32 %v198, %v304
    %v308 = vtanh.pop %v307
    %309 = vmatprep.subr.mxu0 0.0
    %310 = vmatpush1.msra.mxu0 %v99
    %311 = vmatprep.subr.mxu0 0.0
    %312 = vmatpush1.msra.mxu0 %v98
    %313 = vmatprep.subr.mxu0 0.0
    %314 = vmatpush1.msra.mxu0 %v97
    %315 = vmatprep.subr.mxu0 0.0
    %316 = vmatpush1.msra.mxu0 %v96
    %317 = vmatprep.subr.mxu0 0.0
    %318 = vmatpush1.msra.mxu0 %v95
    %319 = vmatprep.subr.mxu0 0.0
    %320 = vmatpush1.msra.mxu0 %v94
    %321 = vmatprep.subr.mxu0 0.0
    %322 = vmatpush1.msra.mxu0 %v93
    %323 = vmatprep.subr.mxu0 0.0
    %324 = vmatpush1.msra.mxu0 %v92
    %325 = vmatprep.subr.mxu0 0.0
    %326 = vmatpush1.msra.mxu0 %v91
    %327 = vmatprep.subr.mxu0 0.0
    %328 = vmatpush1.msra.mxu0 %v90
    %329 = vmatprep.subr.mxu0 0.0
    %330 = vmatpush1.msra.mxu0 %v89
    %331 = vmatprep.subr.mxu0 0.0
    %332 = vmatpush1.msra.mxu0 %v88
    %333 = vmatprep.subr.mxu0 0.0
    %334 = vmatpush1.msra.mxu0 %v87
    %335 = vmatprep.subr.mxu0 0.0
    %336 = vmatpush1.msra.mxu0 %v86
    %337 = vmatprep.subr.mxu0 0.0
    %338 = vmatpush1.msra.mxu0 %v85
    %339 = vmatprep.subr.mxu0 0.0
    %340 = vmatpush1.msra.mxu0 %v84
    %341 = vmatprep.subr.mxu0 0.0
    %342 = vmatpush2.msra.mxu0 0.0
    %343 = vmatprep.subr.mxu0 0.0
    %344 = vmatpush2.msra.mxu0 0.0
    %345 = vmatprep.subr.mxu0 0.0
    %346 = vmatpush2.msra.mxu0 0.0
    %347 = vmatprep.subr.mxu0 0.0
    %348 = vmatpush2.msra.mxu0 0.0
    %349 = vmatprep.subr.mxu0 0.0
    %350 = vmatpush2.msra.mxu0 0.0
    %351 = vmatprep.subr.mxu0 0.0
    %352 = vmatpush2.msra.mxu0 0.0
    %353 = vmatprep.subr.mxu0 0.0
    %354 = vmatpush2.msra.mxu0 0.0
    %355 = vmatprep.subr.mxu0 0.0
    %356 = vmatpush2.msra.mxu0 0.0
    %357 = vmatprep.subr.mxu0 0.0
    %358 = vmatpush2.msra.mxu0 0.0
    %359 = vmatprep.subr.mxu0 0.0
    %360 = vmatpush2.msra.mxu0 0.0
    %361 = vmatprep.subr.mxu0 0.0
    %362 = vmatpush2.msra.mxu0 0.0
    %363 = vmatprep.subr.mxu0 0.0
    %364 = vmatpush2.msra.mxu0 0.0
    %365 = vmatprep.subr.mxu0 0.0
    %366 = vmatpush2.msra.mxu0 0.0
    %367 = vmatprep.subr.mxu0 0.0
    %368 = vmatpush2.msra.mxu0 0.0
    %369 = vmatprep.subr.mxu0 0.0
    %370 = vmatpush2.msra.mxu0 0.0
    %371 = vmatprep.subr.mxu0 0.0
    %372 = vmatpush2.msra.mxu0 0.0
    %373 = vmatprep.mubr.f32.mxu0 0.0
    %374 = vmatmul.mubr.f32.gmra.mxu0 %v308
    %v375 = vpop.f32.mrf.mxu0
    %v376 = vadd.f32 0.0, %v375
    %v377 = vpop.f32.mrf.mxu0
    %378 = vdwg.mxu0
    %v379 = vadd.f32 %v203, %v376
    %v380 = vtanh.pop %v379
    %381 = vmatprep.subr.mxu0 0.0
    %382 = vmatpush1.msra.mxu0 %v99
    %383 = vmatprep.subr.mxu0 0.0
    %384 = vmatpush1.msra.mxu0 %v98
    %385 = vmatprep.subr.mxu0 0.0
    %386 = vmatpush1.msra.mxu0 %v97
    %387 = vmatprep.subr.mxu0 0.0
    %388 = vmatpush1.msra.mxu0 %v96
    %389 = vmatprep.subr.mxu0 0.0
    %390 = vmatpush1.msra.mxu0 %v95
    %391 = vmatprep.subr.mxu0 0.0
    %392 = vmatpush1.msra.mxu0 %v94
    %393 = vmatprep.subr.mxu0 0.0
    %394 = vmatpush1.msra.mxu0 %v93
    %395 = vmatprep.subr.mxu0 0.0
    %396 = vmatpush1.msra.mxu0 %v92
    %397 = vmatprep.subr.mxu0 0.0
    %398 = vmatpush1.msra.mxu0 %v91
    %399 = vmatprep.subr.mxu0 0.0
    %400 = vmatpush1.msra.mxu0 %v90
    %401 = vmatprep.subr.mxu0 0.0
    %402 = vmatpush1.msra.mxu0 %v89
    %403 = vmatprep.subr.mxu0 0.0
    %404 = vmatpush1.msra.mxu0 %v88
    %405 = vmatprep.subr.mxu0 0.0
    %406 = vmatpush1.msra.mxu0 %v87
    %407 = vmatprep.subr.mxu0 0.0
    %408 = vmatpush1.msra.mxu0 %v86
    %409 = vmatprep.subr.mxu0 0.0
    %410 = vmatpush1.msra.mxu0 %v85
    %411 = vmatprep.subr.mxu0 0.0
    %412 = vmatpush1.msra.mxu0 %v84
    %413 = vmatprep.subr.mxu0 0.0
    %414 = vmatpush2.msra.mxu0 0.0
    %415 = vmatprep.subr.mxu0 0.0
    %416 = vmatpush2.msra.mxu0 0.0
    %417 = vmatprep.subr.mxu0 0.0
    %418 = vmatpush2.msra.mxu0 0.0
    %419 = vmatprep.subr.mxu0 0.0
    %420 = vmatpush2.msra.mxu0 0.0
    %421 = vmatprep.subr.mxu0 0.0
    %422 = vmatpush2.msra.mxu0 0.0
    %423 = vmatprep.subr.mxu0 0.0
    %424 = vmatpush2.msra.mxu0 0.0
    %425 = vmatprep.subr.mxu0 0.0
    %426 = vmatpush2.msra.mxu0 0.0
    %427 = vmatprep.subr.mxu0 0.0
    %428 = vmatpush2.msra.mxu0 0.0
    %429 = vmatprep.subr.mxu0 0.0
    %430 = vmatpush2.msra.mxu0 0.0
    %431 = vmatprep.subr.mxu0 0.0
    %432 = vmatpush2.msra.mxu0 0.0
    %433 = vmatprep.subr.mxu0 0.0
    %434 = vmatpush2.msra.mxu0 0.0
    %435 = vmatprep.subr.mxu0 0.0
    %436 = vmatpush2.msra.mxu0 0.0
    %437 = vmatprep.subr.mxu0 0.0
    %438 = vmatpush2.msra.mxu0 0.0
    %439 = vmatprep.subr.mxu0 0.0
    %440 = vmatpush2.msra.mxu0 0.0
    %441 = vmatprep.subr.mxu0 0.0
    %442 = vmatpush2.msra.mxu0 0.0
    %443 = vmatprep.subr.mxu0 0.0
    %444 = vmatpush2.msra.mxu0 0.0
    %445 = vmatprep.mubr.f32.mxu0 0.0
    %446 = vmatmul.mubr.f32.gmra.mxu0 %v380
    %v447 = vpop.f32.mrf.mxu0
    %v448 = vadd.f32 0.0, %v447
    %v449 = vpop.f32.mrf.mxu0
    %450 = vdwg.mxu0
    %v451 = vadd.f32 %v208, %v448
    %v452 = vtanh.pop %v451
    %453 = vmatprep.subr.mxu0 0.0
    %454 = vmatpush1.msra.mxu0 %v99
    %455 = vmatprep.subr.mxu0 0.0
    %456 = vmatpush1.msra.mxu0 %v98
    %457 = vmatprep.subr.mxu0 0.0
    %458 = vmatpush1.msra.mxu0 %v97
    %459 = vmatprep.subr.mxu0 0.0
    %460 = vmatpush1.msra.mxu0 %v96
    %461 = vmatprep.subr.mxu0 0.0
    %462 = vmatpush1.msra.mxu0 %v95
    %463 = vmatprep.subr.mxu0 0.0
    %464 = vmatpush1.msra.mxu0 %v94
    %465 = vmatprep.subr.mxu0 0.0
    %466 = vmatpush1.msra.mxu0 %v93
    %467 = vmatprep.subr.mxu0 0.0
    %468 = vmatpush1.msra.mxu0 %v92
    %469 = vmatprep.subr.mxu0 0.0
    %470 = vmatpush1.msra.mxu0 %v91
    %471 = vmatprep.subr.mxu0 0.0
    %472 = vmatpush1.msra.mxu0 %v90
    %473 = vmatprep.subr.mxu0 0.0
    %474 = vmatpush1.msra.mxu0 %v89
    %475 = vmatprep.subr.mxu0 0.0
    %476 = vmatpush1.msra.mxu0 %v88
    %477 = vmatprep.subr.mxu0 0.0
    %478 = vmatpush1.msra.mxu0 %v87
    %479 = vmatprep.subr.mxu0 0.0
    %480 = vmatpush1.msra.mxu0 %v86
    %481 = vmatprep.subr.mxu0 0.0
    %482 = vmatpush1.msra.mxu0 %v85
    %483 = vmatprep.subr.mxu0 0.0
    %484 = vmatpush1.msra.mxu0 %v84
    %485 = vmatprep.subr.mxu0 0.0
    %486 = vmatpush2.msra.mxu0 0.0
    %487 = vmatprep.subr.mxu0 0.0
    %488 = vmatpush2.msra.mxu0 0.0
    %489 = vmatprep.subr.mxu0 0.0
    %490 = vmatpush2.msra.mxu0 0.0
    %491 = vmatprep.subr.mxu0 0.0
    %492 = vmatpush2.msra.mxu0 0.0
    %493 = vmatprep.subr.mxu0 0.0
    %494 = vmatpush2.msra.mxu0 0.0
    %495 = vmatprep.subr.mxu0 0.0
    %496 = vmatpush2.msra.mxu0 0.0
    %497 = vmatprep.subr.mxu0 0.0
    %498 = vmatpush2.msra.mxu0 0.0
    %499 = vmatprep.subr.mxu0 0.0
    %500 = vmatpush2.msra.mxu0 0.0
    %501 = vmatprep.subr.mxu0 0.0
    %502 = vmatpush2.msra.mxu0 0.0
    %503 = vmatprep.subr.mxu0 0.0
    %504 = vmatpush2.msra.mxu0 0.0
    %505 = vmatprep.subr.mxu0 0.0
    %506 = vmatpush2.msra.mxu0 0.0
    %507 = vmatprep.subr.mxu0 0.0
    %508 = vmatpush2.msra.mxu0 0.0
    %509 = vmatprep.subr.mxu0 0.0
    %510 = vmatpush2.msra.mxu0 0.0
    %511 = vmatprep.subr.mxu0 0.0
    %512 = vmatpush2.msra.mxu0 0.0
    %513 = vmatprep.subr.mxu0 0.0
    %514 = vmatpush2.msra.mxu0 0.0
    %515 = vmatprep.subr.mxu0 0.0
    %516 = vmatpush2.msra.mxu0 0.0
    %517 = vmatprep.mubr.f32.mxu0 0.0
    %518 = vmatmul.mubr.f32.gmra.mxu0 %v452
    %v519 = vpop.f32.mrf.mxu0
    %v520 = vadd.f32 0.0, %v519
    %v521 = vpop.f32.mrf.mxu0
    %522 = vdwg.mxu0
    %v523 = vadd.f32 %v213, %v520
    %v524 = vtanh.pop %v523
    %525 = vmatprep.subr.mxu0 0.0
    %526 = vmatpush1.msra.mxu0 %v99
    %527 = vmatprep.subr.mxu0 0.0
    %528 = vmatpush1.msra.mxu0 %v98
    %529 = vmatprep.subr.mxu0 0.0
    %530 = vmatpush1.msra.mxu0 %v97
    %531 = vmatprep.subr.mxu0 0.0
    %532 = vmatpush1.msra.mxu0 %v96
    %533 = vmatprep.subr.mxu0 0.0
    %534 = vmatpush1.msra.mxu0 %v95
    %535 = vmatprep.subr.mxu0 0.0
    %536 = vmatpush1.msra.mxu0 %v94
    %537 = vmatprep.subr.mxu0 0.0
    %538 = vmatpush1.msra.mxu0 %v93
    %539 = vmatprep.subr.mxu0 0.0
    %540 = vmatpush1.msra.mxu0 %v92
    %541 = vmatprep.subr.mxu0 0.0
    %542 = vmatpush1.msra.mxu0 %v91
    %543 = vmatprep.subr.mxu0 0.0
    %544 = vmatpush1.msra.mxu0 %v90
    %545 = vmatprep.subr.mxu0 0.0
    %546 = vmatpush1.msra.mxu0 %v89
    %547 = vmatprep.subr.mxu0 0.0
    %548 = vmatpush1.msra.mxu0 %v88
    %549 = vmatprep.subr.mxu0 0.0
    %550 = vmatpush1.msra.mxu0 %v87
    %551 = vmatprep.subr.mxu0 0.0
    %552 = vmatpush1.msra.mxu0 %v86
    %553 = vmatprep.subr.mxu0 0.0
    %554 = vmatpush1.msra.mxu0 %v85
    %555 = vmatprep.subr.mxu0 0.0
    %556 = vmatpush1.msra.mxu0 %v84
    %557 = vmatprep.subr.mxu0 0.0
    %558 = vmatpush2.msra.mxu0 0.0
    %559 = vmatprep.subr.mxu0 0.0
    %560 = vmatpush2.msra.mxu0 0.0
    %561 = vmatprep.subr.mxu0 0.0
    %562 = vmatpush2.msra.mxu0 0.0
    %563 = vmatprep.subr.mxu0 0.0
    %564 = vmatpush2.msra.mxu0 0.0
    %565 = vmatprep.subr.mxu0 0.0
    %566 = vmatpush2.msra.mxu0 0.0
    %567 = vmatprep.subr.mxu0 0.0
    %568 = vmatpush2.msra.mxu0 0.0
    %569 = vmatprep.subr.mxu0 0.0
    %570 = vmatpush2.msra.mxu0 0.0
    %571 = vmatprep.subr.mxu0 0.0
    %572 = vmatpush2.msra.mxu0 0.0
    %573 = vmatprep.subr.mxu0 0.0
    %574 = vmatpush2.msra.mxu0 0.0
    %575 = vmatprep.subr.mxu0 0.0
    %576 = vmatpush2.msra.mxu0 0.0
    %577 = vmatprep.subr.mxu0 0.0
    %578 = vmatpush2.msra.mxu0 0.0
    %579 = vmatprep.subr.mxu0 0.0
    %580 = vmatpush2.msra.mxu0 0.0
    %581 = vmatprep.subr.mxu0 0.0
    %582 = vmatpush2.msra.mxu0 0.0
    %583 = vmatprep.subr.mxu0 0.0
    %584 = vmatpush2.msra.mxu0 0.0
    %585 = vmatprep.subr.mxu0 0.0
    %586 = vmatpush2.msra.mxu0 0.0
    %587 = vmatprep.subr.mxu0 0.0
    %588 = vmatpush2.msra.mxu0 0.0
    %589 = vmatprep.mubr.f32.mxu0 0.0
    %590 = vmatmul.mubr.f32.gmra.mxu0 %v524
    %v591 = vpop.f32.mrf.mxu0
    %v592 = vadd.f32 0.0, %v591
    %v593 = vpop.f32.mrf.mxu0
    %594 = vdwg.mxu0
    %v595 = vadd.f32 %v218, %v592
    %v596 = vtanh.pop %v595
    %597 = vmatprep.subr.mxu0 0.0
    %598 = vmatpush1.msra.mxu0 %v99
    %599 = vmatprep.subr.mxu0 0.0
    %600 = vmatpush1.msra.mxu0 %v98
    %601 = vmatprep.subr.mxu0 0.0
    %602 = vmatpush1.msra.mxu0 %v97
    %603 = vmatprep.subr.mxu0 0.0
    %604 = vmatpush1.msra.mxu0 %v96
    %605 = vmatprep.subr.mxu0 0.0
    %606 = vmatpush1.msra.mxu0 %v95
    %607 = vmatprep.subr.mxu0 0.0
    %608 = vmatpush1.msra.mxu0 %v94
    %609 = vmatprep.subr.mxu0 0.0
    %610 = vmatpush1.msra.mxu0 %v93
    %611 = vmatprep.subr.mxu0 0.0
    %612 = vmatpush1.msra.mxu0 %v92
    %613 = vmatprep.subr.mxu0 0.0
    %614 = vmatpush1.msra.mxu0 %v91
    %615 = vmatprep.subr.mxu0 0.0
    %616 = vmatpush1.msra.mxu0 %v90
    %617 = vmatprep.subr.mxu0 0.0
    %618 = vmatpush1.msra.mxu0 %v89
    %619 = vmatprep.subr.mxu0 0.0
    %620 = vmatpush1.msra.mxu0 %v88
    %621 = vmatprep.subr.mxu0 0.0
    %622 = vmatpush1.msra.mxu0 %v87
    %623 = vmatprep.subr.mxu0 0.0
    %624 = vmatpush1.msra.mxu0 %v86
    %625 = vmatprep.subr.mxu0 0.0
    %626 = vmatpush1.msra.mxu0 %v85
    %627 = vmatprep.subr.mxu0 0.0
    %628 = vmatpush1.msra.mxu0 %v84
    %629 = vmatprep.subr.mxu0 0.0
    %630 = vmatpush2.msra.mxu0 0.0
    %631 = vmatprep.subr.mxu0 0.0
    %632 = vmatpush2.msra.mxu0 0.0
    %633 = vmatprep.subr.mxu0 0.0
    %634 = vmatpush2.msra.mxu0 0.0
    %635 = vmatprep.subr.mxu0 0.0
    %636 = vmatpush2.msra.mxu0 0.0
    %637 = vmatprep.subr.mxu0 0.0
    %638 = vmatpush2.msra.mxu0 0.0
    %639 = vmatprep.subr.mxu0 0.0
    %640 = vmatpush2.msra.mxu0 0.0
    %641 = vmatprep.subr.mxu0 0.0
    %642 = vmatpush2.msra.mxu0 0.0
    %643 = vmatprep.subr.mxu0 0.0
    %644 = vmatpush2.msra.mxu0 0.0
    %645 = vmatprep.subr.mxu0 0.0
    %646 = vmatpush2.msra.mxu0 0.0
    %647 = vmatprep.subr.mxu0 0.0
    %648 = vmatpush2.msra.mxu0 0.0
    %649 = vmatprep.subr.mxu0 0.0
    %650 = vmatpush2.msra.mxu0 0.0
    %651 = vmatprep.subr.mxu0 0.0
    %652 = vmatpush2.msra.mxu0 0.0
    %653 = vmatprep.subr.mxu0 0.0
    %654 = vmatpush2.msra.mxu0 0.0
    %655 = vmatprep.subr.mxu0 0.0
    %656 = vmatpush2.msra.mxu0 0.0
    %657 = vmatprep.subr.mxu0 0.0
    %658 = vmatpush2.msra.mxu0 0.0
    %659 = vmatprep.subr.mxu0 0.0
    %660 = vmatpush2.msra.mxu0 0.0
    %661 = vmatprep.mubr.f32.mxu0 0.0
    %662 = vmatmul.mubr.f32.gmra.mxu0 %v596
    %v663 = vpop.f32.mrf.mxu0
    %v664 = vadd.f32 0.0, %v663
    %v665 = vpop.f32.mrf.mxu0
    %666 = vdwg.mxu0
    %v667 = vadd.f32 %v223, %v664
    %v668 = vtanh.pop %v667
    %669 = vmatprep.subr.mxu0 0.0
    %670 = vmatpush1.msra.mxu0 %v99
    %671 = vmatprep.subr.mxu0 0.0
    %672 = vmatpush1.msra.mxu0 %v98
    %673 = vmatprep.subr.mxu0 0.0
    %674 = vmatpush1.msra.mxu0 %v97
    %675 = vmatprep.subr.mxu0 0.0
    %676 = vmatpush1.msra.mxu0 %v96
    %677 = vmatprep.subr.mxu0 0.0
    %678 = vmatpush1.msra.mxu0 %v95
    %679 = vmatprep.subr.mxu0 0.0
    %680 = vmatpush1.msra.mxu0 %v94
    %681 = vmatprep.subr.mxu0 0.0
    %682 = vmatpush1.msra.mxu0 %v93
    %683 = vmatprep.subr.mxu0 0.0
    %684 = vmatpush1.msra.mxu0 %v92
    %685 = vmatprep.subr.mxu0 0.0
    %686 = vmatpush1.msra.mxu0 %v91
    %687 = vmatprep.subr.mxu0 0.0
    %688 = vmatpush1.msra.mxu0 %v90
    %689 = vmatprep.subr.mxu0 0.0
    %690 = vmatpush1.msra.mxu0 %v89
    %691 = vmatprep.subr.mxu0 0.0
    %692 = vmatpush1.msra.mxu0 %v88
    %693 = vmatprep.subr.mxu0 0.0
    %694 = vmatpush1.msra.mxu0 %v87
    %695 = vmatprep.subr.mxu0 0.0
    %696 = vmatpush1.msra.mxu0 %v86
    %697 = vmatprep.subr.mxu0 0.0
    %698 = vmatpush1.msra.mxu0 %v85
    %699 = vmatprep.subr.mxu0 0.0
    %700 = vmatpush1.msra.mxu0 %v84
    %701 = vmatprep.subr.mxu0 0.0
    %702 = vmatpush2.msra.mxu0 0.0
    %703 = vmatprep.subr.mxu0 0.0
    %704 = vmatpush2.msra.mxu0 0.0
    %705 = vmatprep.subr.mxu0 0.0
    %706 = vmatpush2.msra.mxu0 0.0
    %707 = vmatprep.subr.mxu0 0.0
    %708 = vmatpush2.msra.mxu0 0.0
    %709 = vmatprep.subr.mxu0 0.0
    %710 = vmatpush2.msra.mxu0 0.0
    %711 = vmatprep.subr.mxu0 0.0
    %712 = vmatpush2.msra.mxu0 0.0
    %713 = vmatprep.subr.mxu0 0.0
    %714 = vmatpush2.msra.mxu0 0.0
    %715 = vmatprep.subr.mxu0 0.0
    %716 = vmatpush2.msra.mxu0 0.0
    %717 = vmatprep.subr.mxu0 0.0
    %718 = vmatpush2.msra.mxu0 0.0
    %719 = vmatprep.subr.mxu0 0.0
    %720 = vmatpush2.msra.mxu0 0.0
    %721 = vmatprep.subr.mxu0 0.0
    %722 = vmatpush2.msra.mxu0 0.0
    %723 = vmatprep.subr.mxu0 0.0
    %724 = vmatpush2.msra.mxu0 0.0
    %725 = vmatprep.subr.mxu0 0.0
    %726 = vmatpush2.msra.mxu0 0.0
    %727 = vmatprep.subr.mxu0 0.0
    %728 = vmatpush2.msra.mxu0 0.0
    %729 = vmatprep.subr.mxu0 0.0
    %730 = vmatpush2.msra.mxu0 0.0
    %731 = vmatprep.subr.mxu0 0.0
    %732 = vmatpush2.msra.mxu0 0.0
    %733 = vmatprep.mubr.f32.mxu0 0.0
    %734 = vmatmul.mubr.f32.gmra.mxu0 %v668
    %v735 = vpop.f32.mrf.mxu0
    %v736 = vadd.f32 0.0, %v735
    %v737 = vpop.f32.mrf.mxu0
    %738 = vdwg.mxu0
    %v739 = vadd.f32 %v228, %v736
    %v740 = vtanh.pop %v739
    %741 = vmatprep.subr.mxu0 0.0
    %742 = vmatpush1.msra.mxu0 %v99
    %743 = vmatprep.subr.mxu0 0.0
    %744 = vmatpush1.msra.mxu0 %v98
    %745 = vmatprep.subr.mxu0 0.0
    %746 = vmatpush1.msra.mxu0 %v97
    %747 = vmatprep.subr.mxu0 0.0
    %748 = vmatpush1.msra.mxu0 %v96
    %749 = vmatprep.subr.mxu0 0.0
    %750 = vmatpush1.msra.mxu0 %v95
    %751 = vmatprep.subr.mxu0 0.0
    %752 = vmatpush1.msra.mxu0 %v94
    %753 = vmatprep.subr.mxu0 0.0
    %754 = vmatpush1.msra.mxu0 %v93
    %755 = vmatprep.subr.mxu0 0.0
    %756 = vmatpush1.msra.mxu0 %v92
    %757 = vmatprep.subr.mxu0 0.0
    %758 = vmatpush1.msra.mxu0 %v91
    %759 = vmatprep.subr.mxu0 0.0
    %760 = vmatpush1.msra.mxu0 %v90
    %761 = vmatprep.subr.mxu0 0.0
    %762 = vmatpush1.msra.mxu0 %v89
    %763 = vmatprep.subr.mxu0 0.0
    %764 = vmatpush1.msra.mxu0 %v88
    %765 = vmatprep.subr.mxu0 0.0
    %766 = vmatpush1.msra.mxu0 %v87
    %767 = vmatprep.subr.mxu0 0.0
    %768 = vmatpush1.msra.mxu0 %v86
    %769 = vmatprep.subr.mxu0 0.0
    %770 = vmatpush1.msra.mxu0 %v85
    %771 = vmatprep.subr.mxu0 0.0
    %772 = vmatpush1.msra.mxu0 %v84
    %773 = vmatprep.subr.mxu0 0.0
    %774 = vmatpush2.msra.mxu0 0.0
    %775 = vmatprep.subr.mxu0 0.0
    %776 = vmatpush2.msra.mxu0 0.0
    %777 = vmatprep.subr.mxu0 0.0
    %778 = vmatpush2.msra.mxu0 0.0
    %779 = vmatprep.subr.mxu0 0.0
    %780 = vmatpush2.msra.mxu0 0.0
    %781 = vmatprep.subr.mxu0 0.0
    %782 = vmatpush2.msra.mxu0 0.0
    %783 = vmatprep.subr.mxu0 0.0
    %784 = vmatpush2.msra.mxu0 0.0
    %785 = vmatprep.subr.mxu0 0.0
    %786 = vmatpush2.msra.mxu0 0.0
    %787 = vmatprep.subr.mxu0 0.0
    %788 = vmatpush2.msra.mxu0 0.0
    %789 = vmatprep.subr.mxu0 0.0
    %790 = vmatpush2.msra.mxu0 0.0
    %791 = vmatprep.subr.mxu0 0.0
    %792 = vmatpush2.msra.mxu0 0.0
    %793 = vmatprep.subr.mxu0 0.0
    %794 = vmatpush2.msra.mxu0 0.0
    %795 = vmatprep.subr.mxu0 0.0
    %796 = vmatpush2.msra.mxu0 0.0
    %797 = vmatprep.subr.mxu0 0.0
    %798 = vmatpush2.msra.mxu0 0.0
    %799 = vmatprep.subr.mxu0 0.0
    %800 = vmatpush2.msra.mxu0 0.0
    %801 = vmatprep.subr.mxu0 0.0
    %802 = vmatpush2.msra.mxu0 0.0
    %803 = vmatprep.subr.mxu0 0.0
    %804 = vmatpush2.msra.mxu0 0.0
    %805 = vmatprep.mubr.f32.mxu0 0.0
    %806 = vmatmul.mubr.f32.gmra.mxu0 %v740
    %v807 = vpop.f32.mrf.mxu0
    %v808 = vadd.f32 0.0, %v807
    %v809 = vpop.f32.mrf.mxu0
    %810 = vdwg.mxu0
    %v811 = vadd.f32 %v233, %v808
    %v812 = vtanh.pop %v811
    %813 = vst [vmem:[#allocation2] sm:$0xff] %v812
    // Predicated region
    $region46: #{tpu_custom_call.1} parent=1 // pred_check
      %p814 = pneg %p79
    $region47: #{tpu_custom_call.1} parent=1 // pred_check_branch
      %816 = sbr.rel (%p814) target = $region49
    $region48: #{tpu_custom_call.1} parent=1 // pred_region
      %v817 = vld [vmem:[#allocation2] sm:$0xff]
      %v818 = vld [vmem:[#allocation9] sm:$0xff]
      %v819 = vld [vmem:[#allocation9 + $0x8] sm:$0xff]
      %v820 = vld [vmem:[#allocation9 + $0x10] sm:$0xff]
      %v821 = vld [vmem:[#allocation9 + $0x18] sm:$0xff]
      %v822 = vld [vmem:[#allocation9 + $0x20] sm:$0xff]
      %v823 = vld [vmem:[#allocation9 + $0x28] sm:$0xff]
      %v824 = vld [vmem:[#allocation9 + $0x30] sm:$0xff]
      %v825 = vld [vmem:[#allocation9 + $0x38] sm:$0xff]
      %v826 = vld [vmem:[#allocation9 + $0x40] sm:$0xff]
      %v827 = vld [vmem:[#allocation9 + $0x48] sm:$0xff]
      %v828 = vld [vmem:[#allocation9 + $0x50] sm:$0xff]
      %v829 = vld [vmem:[#allocation9 + $0x58] sm:$0xff]
      %v830 = vld [vmem:[#allocation9 + $0x60] sm:$0xff]
      %v831 = vld [vmem:[#allocation9 + $0x68] sm:$0xff]
      %v832 = vld [vmem:[#allocation9 + $0x70] sm:$0xff]
      %v833 = vld [vmem:[#allocation9 + $0x78] sm:$0xff]
      %v834 = vld [vmem:[%s5] sm:$0x1]
      %v836 = vlaneseq
      %v837 = vshrl.u32 %v836, 7
      %v838 = vsub.s32 0, %v837
      %v839 = vrot.slane %v834, %v838
      %841 = vmatprep.subr.mxu0 0.0
      %842 = vmatpush1.msra.mxu0 %v833
      %843 = vmatprep.subr.mxu0 0.0
      %844 = vmatpush1.msra.mxu0 %v832
      %845 = vmatprep.subr.mxu0 0.0
      %846 = vmatpush1.msra.mxu0 %v831
      %847 = vmatprep.subr.mxu0 0.0
      %848 = vmatpush1.msra.mxu0 %v830
      %849 = vmatprep.subr.mxu0 0.0
      %850 = vmatpush1.msra.mxu0 %v829
      %851 = vmatprep.subr.mxu0 0.0
      %852 = vmatpush1.msra.mxu0 %v828
      %853 = vmatprep.subr.mxu0 0.0
      %854 = vmatpush1.msra.mxu0 %v827
      %855 = vmatprep.subr.mxu0 0.0
      %856 = vmatpush1.msra.mxu0 %v826
      %857 = vmatprep.subr.mxu0 0.0
      %858 = vmatpush1.msra.mxu0 %v825
      %859 = vmatprep.subr.mxu0 0.0
      %860 = vmatpush1.msra.mxu0 %v824
      %861 = vmatprep.subr.mxu0 0.0
      %862 = vmatpush1.msra.mxu0 %v823
      %863 = vmatprep.subr.mxu0 0.0
      %864 = vmatpush1.msra.mxu0 %v822
      %865 = vmatprep.subr.mxu0 0.0
      %866 = vmatpush1.msra.mxu0 %v821
      %867 = vmatprep.subr.mxu0 0.0
      %868 = vmatpush1.msra.mxu0 %v820
      %869 = vmatprep.subr.mxu0 0.0
      %870 = vmatpush1.msra.mxu0 %v819
      %871 = vmatprep.subr.mxu0 0.0
      %872 = vmatpush1.msra.mxu0 %v818
      %873 = vmatprep.subr.mxu0 0.0
      %874 = vmatpush2.msra.mxu0 0.0
      %875 = vmatprep.subr.mxu0 0.0
      %876 = vmatpush2.msra.mxu0 0.0
      %877 = vmatprep.subr.mxu0 0.0
      %878 = vmatpush2.msra.mxu0 0.0
      %879 = vmatprep.subr.mxu0 0.0
      %880 = vmatpush2.msra.mxu0 0.0
      %881 = vmatprep.subr.mxu0 0.0
      %882 = vmatpush2.msra.mxu0 0.0
      %883 = vmatprep.subr.mxu0 0.0
      %884 = vmatpush2.msra.mxu0 0.0
      %885 = vmatprep.subr.mxu0 0.0
      %886 = vmatpush2.msra.mxu0 0.0
      %887 = vmatprep.subr.mxu0 0.0
      %888 = vmatpush2.msra.mxu0 0.0
      %889 = vmatprep.subr.mxu0 0.0
      %890 = vmatpush2.msra.mxu0 0.0
      %891 = vmatprep.subr.mxu0 0.0
      %892 = vmatpush2.msra.mxu0 0.0
      %893 = vmatprep.subr.mxu0 0.0
      %894 = vmatpush2.msra.mxu0 0.0
      %895 = vmatprep.subr.mxu0 0.0
      %896 = vmatpush2.msra.mxu0 0.0
      %897 = vmatprep.subr.mxu0 0.0
      %898 = vmatpush2.msra.mxu0 0.0
      %899 = vmatprep.subr.mxu0 0.0
      %900 = vmatpush2.msra.mxu0 0.0
      %901 = vmatprep.subr.mxu0 0.0
      %902 = vmatpush2.msra.mxu0 0.0
      %903 = vmatprep.subr.mxu0 0.0
      %904 = vmatpush2.msra.mxu0 0.0
      %905 = vmatprep.mubr.f32.mxu0 0.0
      %906 = vmatmul.mubr.f32.gmra.mxu0 %v817
      %v907 = vpop.f32.mrf.mxu0
      %v908 = vadd.f32 %v839, %v907
      %v909 = vpop.f32.mrf.mxu0
      %910 = vdwg.mxu0
      %v911 = vlaneseq
      %v912 = vand.u32 %v911, 127
      %vm913 = vcmp.lt.s32.totalorder %v912, 8
      %v914 = vsel %vm913, %v908, -1e+30
      %915 = vmax.xlane.f32.xlu0 %v914
      %v916 = vpop.xlane.xlu0 %915
      %v917 = vsub.f32 %v914, %v916
      %v918 = vmul.f32 %v917, 1.442695
      %v919 = vpow.pop %v918
      %920 = vadd.xlane.f32.xlu0 %v919
      %v921 = vpop.xlane.xlu0 %920
      %v922 = vlog2.pop %v921
      %v923 = vmul.f32 %v922, 0.6931472
      %v924 = vsub.f32 %v917, %v923
      %925 = vst [vmem:[#allocation11] sm:$0xff] %v924
    $region49: #{tpu_custom_call.1} parent=1 // pred_fallthru
      _
    // Predicated region
    $region50: #{tpu_custom_call.1} parent=1 // pred_check
      _
    $region51: #{tpu_custom_call.1} parent=1 // pred_check_branch
      %927 = sbr.rel (0) target = $region53
    $region52: #{tpu_custom_call.1} parent=1 // pred_region
      %s929 = ssub.s32 128, 128
      %930 = vsyncadd [#allocation5], %s929
      %s932 = sshll.u32 [#allocation11], 4
      %s933 = int_to_ptr.vmem [resolvable:$true] %s932
      %935 = dma.vmem_to_hbm [thread:$0]  %s933, 128, %s6, [#allocation5]
    $region53: #{tpu_custom_call.1} parent=1 // pred_fallthru
      _
    // Predicated region
    $region54: #{tpu_custom_call.1} parent=1 // pred_check
      _
    $region55: #{tpu_custom_call.1} parent=1 // pred_check_branch
      %937 = sbr.rel (0) target = $region57
    $region56: #{tpu_custom_call.1} parent=1 // pred_region
      %938 = dma.done [#allocation5], 128
    $region57: #{tpu_custom_call.1} parent=1 // pred_fallthru
      _
    %939 = vsyncpa [#allocation4], 1
    %940 = vsyncpa [#allocation7], 1
    %941 = vsyncpa [#allocation10], 1
    %942 = vsyncpa [#allocation5], 1

</llo_original>
